<compile_context>
chip_gen: v5e
topology: v5e:2x2
jax: 0.10.0
libtpu: 0.0.40
codegen_flags: <defaults>
</compile_context>

<pallas_src>
import jax
import jax.numpy as jnp
from jax.experimental import pallas as pl
from jax.experimental.pallas import tpu as pltpu

# --- model hyper-parameters (args) -------------------------------------------
B = 4          # batch size
G = 32         # number of genes (input dim); encoder_layer_list = [G, H]
H = 16         # encoder hidden size
T = 8          # args['n_TP']
S = 2          # args['z_sample']
EPS = 1e-6     # args['eps']
BN_EPS = 1e-5  # BatchNorm1d eps (torch default)

SB = S * B

# --- static-parameter slab layout: one (PARAM_ROWS, 128) f32 VMEM slab --------
W0_R = 0                    # (G, G)   encoder layer 0, BN folded
W1_R = W0_R + G             # (G, H)   encoder layer 1, BN folded
W2_R = W1_R + G             # (H, H)   encoder layer 2, BN folded
WML_R = W2_R + H            # (H, 2T)  fused [w_mu | w_logvar] head
WTG_R = WML_R + H           # (T, G)   decoder_TP_Gene weight, mask pre-applied
WGG_R = WTG_R + T           # (G, G)   decoder_Gene_Gene weight, mask pre-applied
BIAS_R = WGG_R + G          # 6 bias rows: b0, b1, b2, bml, btg, bgg
ALPHA_R = BIAS_R + 6        # 3 rows: PReLU alphas, lane-broadcast
PARAM_ROWS = ((ALPHA_R + 3 + 7) // 8) * 8   # 152

# --- per-call activation slab: one (ACT_ROWS, 128) f32 VMEM slab ---------------
NOISE_R = 0                          # rows [0, SB), cols [0, T): standard normals
X_R = ((SB + 7) // 8) * 8            # rows [X_R, X_R+SB), cols [0, G): X tiled S times
ACT_ROWS = ((X_R + SB + 7) // 8) * 8

# --- packed-output column layout (single lane-dense (SB, 128) slab) ------------
OUT_W = 128
XREC_OFF = 0            # [0, G)          X_rec rows (all SB rows)
Z_OFF = G               # [G, G+T)        z rows     (all SB rows)
MU_OFF = G + T          # [G+T, G+2T)     mu         (duplicated; wrapper takes first B rows)
SC_OFF = G + 2 * T      # [G+2T, G+3T)    q.scale    (duplicated; wrapper takes first B rows)


# --- Pallas kernel: full fused forward pass ----------------------------------
def igtp_kernel(p_ref, act_ref, out_ref):
    # static sub-views of the single resident parameter slab (zero extra DMAs)
    w0 = p_ref[W0_R:W0_R + G, 0:G]
    w1 = p_ref[W1_R:W1_R + G, 0:H]
    w2 = p_ref[W2_R:W2_R + H, 0:H]
    wml = p_ref[WML_R:WML_R + H, 0:2 * T]
    wtg = p_ref[WTG_R:WTG_R + T, 0:G]
    wgg = p_ref[WGG_R:WGG_R + G, 0:G]
    b0 = p_ref[BIAS_R + 0:BIAS_R + 1, 0:G]
    b1 = p_ref[BIAS_R + 1:BIAS_R + 2, 0:H]
    b2 = p_ref[BIAS_R + 2:BIAS_R + 3, 0:H]
    bml = p_ref[BIAS_R + 3:BIAS_R + 4, 0:2 * T]
    btg = p_ref[BIAS_R + 4:BIAS_R + 5, 0:G]
    bgg = p_ref[BIAS_R + 5:BIAS_R + 6, 0:G]
    a0 = p_ref[ALPHA_R + 0:ALPHA_R + 1, 0:G]   # PReLU slopes, lane-broadcast rows
    a1 = p_ref[ALPHA_R + 1:ALPHA_R + 2, 0:H]
    a2 = p_ref[ALPHA_R + 2:ALPHA_R + 3, 0:H]

    # per-call activations (one slab): noise rows + X tiled sample-major
    noise = act_ref[NOISE_R:NOISE_R + SB, 0:T]   # (SB, T)
    x = act_ref[X_R:X_R + SB, 0:G]               # (SB, G)  == [X; X; ...] (S copies)

    def lin_prelu(h, w, b, a):
        # Linear + folded BatchNorm + PReLU (Dropout = identity in eval)
        y = jnp.dot(h, w, preferred_element_type=jnp.float32) + b
        return jnp.where(y >= 0.0, y, a * y)

    h = lin_prelu(x, w0, b0, a0)
    h = lin_prelu(h, w1, b1, a1)
    h = lin_prelu(h, w2, b2, a2)

    # fused mu / logvar head: one (SB, 2T) matmul, split by lane slice.
    # Rows are S identical copies per cell, so mu/scale come out sample-major for free.
    ml = jnp.dot(h, wml, preferred_element_type=jnp.float32) + bml
    mu = ml[:, 0:T]
    logvar = ml[:, T:2 * T]
    scale = jnp.sqrt(jnp.exp(logvar) + EPS)      # q.scale; always > 0, torch fix-up is dead

    # reparameterized samples built entirely in vregs (no out_ref round-trip)
    z = mu + scale * noise                       # (SB, T)

    # decoders: one matmul each over all samples
    tp = jnp.maximum(jnp.dot(z, wtg, preferred_element_type=jnp.float32) + btg, 0.0)
    xrec = jnp.dot(tp, wgg, preferred_element_type=jnp.float32) + bgg

    # single lane-dense (SB, 128) output slab
    out_ref[...] = jnp.zeros_like(out_ref)       # deterministic pad lanes
    out_ref[:, XREC_OFF:XREC_OFF + G] = xrec
    out_ref[:, Z_OFF:Z_OFF + T] = z
    out_ref[:, MU_OFF:MU_OFF + T] = mu           # duplicated rows; wrapper slices [:B]
    out_ref[:, SC_OFF:SC_OFF + T] = scale


# --- one-time host-side folding & packing (NOT in the per-call path) ----------
def prepare_param_slab(p):
    """Fold BN into the encoder linears, pre-apply pathway masks, fuse mu/logvar,
    and pack everything into one (PARAM_ROWS, 128) f32 slab. Run once at load time."""
    f32 = jnp.float32
    w0f = p["w0"] * p["s0"]
    b0f = p["b0"] * p["s0"] + p["t0"]
    w1f = p["w1"] * p["s1"]
    b1f = p["b1"] * p["s1"] + p["t1"]
    w2f = p["w2"] * p["s2"]
    b2f = p["b2"] * p["s2"] + p["t2"]

    wml = jnp.concatenate([p["w_mu"], p["w_lv"]], axis=1)   # (H, 2T)
    bml = jnp.concatenate([p["b_mu"], p["b_lv"]], axis=1)   # (1, 2T)

    wtgm = p["w_tg"] * p["m_tg"]                            # masks pre-applied
    wggm = p["w_gg"] * p["m_gg"]

    slab = jnp.zeros((PARAM_ROWS, 128), f32)
    slab = slab.at[W0_R:W0_R + G, :G].set(w0f)
    slab = slab.at[W1_R:W1_R + G, :H].set(w1f)
    slab = slab.at[W2_R:W2_R + H, :H].set(w2f)
    slab = slab.at[WML_R:WML_R + H, :2 * T].set(wml)
    slab = slab.at[WTG_R:WTG_R + T, :G].set(wtgm)
    slab = slab.at[WGG_R:WGG_R + G, :G].set(wggm)
    slab = slab.at[BIAS_R + 0, :G].set(b0f[0])
    slab = slab.at[BIAS_R + 1, :H].set(b1f[0])
    slab = slab.at[BIAS_R + 2, :H].set(b2f[0])
    slab = slab.at[BIAS_R + 3, :2 * T].set(bml[0])
    slab = slab.at[BIAS_R + 4, :G].set(p["b_tg"][0])
    slab = slab.at[BIAS_R + 5, :G].set(p["b_gg"][0])
    # PReLU slopes broadcast across their rows (sublane-broadcast pattern in-kernel)
    slab = slab.at[ALPHA_R:ALPHA_R + 3, :].set(
        p["alphas"][:, None] * jnp.ones((1, 128), f32))
    return jax.device_put(slab)


# --- per-call wrapper ----------------------------------------------------------
@jax.jit
def igtp_forward(X, noise, param_slab):
    """X: (B, G) counts; noise: (S, B, T) standard normals; param_slab: prepacked."""
    f32 = jnp.float32
    noise_flat = noise.reshape(SB, T)                  # sample-major rows
    x_rep = jnp.tile(X, (S, 1))                        # (SB, G): feed samples as rows

    act = jnp.zeros((ACT_ROWS, 128), f32)
    act = act.at[NOISE_R:NOISE_R + SB, :T].set(noise_flat)
    act = act.at[X_R:X_R + SB, :G].set(x_rep)

    vmem = pl.BlockSpec(memory_space=pltpu.MemorySpace.VMEM)
    packed = pl.pallas_call(
        igtp_kernel,
        out_shape=jax.ShapeDtypeStruct((SB, OUT_W), f32),
        in_specs=[vmem, vmem],
        out_specs=vmem,
    )(param_slab, act)

    # unpack the lane-dense output slab
    x_rec = packed[:, XREC_OFF:XREC_OFF + G].reshape(S, B, G)
    z = packed[:, Z_OFF:Z_OFF + T].reshape(S, B, T)
    mu = packed[:B, MU_OFF:MU_OFF + T]
    q_scale = packed[:B, SC_OFF:SC_OFF + T]

    return {
        "X_rec": x_rec,
        "p": (jnp.zeros_like(mu), jnp.ones_like(q_scale)),  # Normal(0, 1) params
        "q": (mu, q_scale),                                  # Normal(mu, scale) params
        "X": X,
        "z": z,
    }


# --- deterministic parameter init (raw torch-style params) --------------------
def init_params(key):
    ks = jax.random.split(key, 12)

    def lin(k, fan_in, fan_out):
        kw, kb = jax.random.split(k)
        bound = 1.0 / jnp.sqrt(fan_in)
        w = jax.random.uniform(kw, (fan_in, fan_out), jnp.float32, -bound, bound)
        b = jax.random.uniform(kb, (1, fan_out), jnp.float32, -bound, bound)
        return w, b

    def bn(feat):
        # gamma=1, beta=0, running_mean=0, running_var=1  -> eval-mode fold
        gamma = jnp.ones((1, feat), jnp.float32)
        beta = jnp.zeros((1, feat), jnp.float32)
        mean = jnp.zeros((1, feat), jnp.float32)
        var = jnp.ones((1, feat), jnp.float32)
        scale = gamma / jnp.sqrt(var + BN_EPS)
        shift = beta - mean * scale
        return scale, shift

    p = {}
    p["w0"], p["b0"] = lin(ks[0], G, G)
    p["s0"], p["t0"] = bn(G)
    p["w1"], p["b1"] = lin(ks[1], G, H)
    p["s1"], p["t1"] = bn(H)
    p["w2"], p["b2"] = lin(ks[2], H, H)
    p["s2"], p["t2"] = bn(H)
    p["w_mu"], p["b_mu"] = lin(ks[3], H, T)
    p["w_lv"], p["b_lv"] = lin(ks[4], H, T)
    p["w_tg"], p["b_tg"] = lin(ks[5], T, G)
    p["w_gg"], p["b_gg"] = lin(ks[6], G, G)
    # binary pathway / PPI masks (mask_list_dict)
    p["m_tg"] = jax.random.bernoulli(ks[7], 0.5, (T, G)).astype(jnp.float32)
    p["m_gg"] = jax.random.bernoulli(ks[8], 0.5, (G, G)).astype(jnp.float32)
    # PReLU slopes (torch default init = 0.25)
    p["alphas"] = jnp.full((3,), 0.25, jnp.float32)
    return p


# --- pure-JAX reference for verification --------------------------------------
def ref_forward(X, p, noise):
    def prelu(x, a):
        return jnp.where(x >= 0.0, x, a * x)

    h = X
    for i, (w, b, sc, sh) in enumerate(
        [(p["w0"], p["b0"], p["s0"], p["t0"]),
         (p["w1"], p["b1"], p["s1"], p["t1"]),
         (p["w2"], p["b2"], p["s2"], p["t2"])]
    ):
        h = h @ w + b
        h = h * sc + sh
        h = prelu(h, p["alphas"][i])
    mu = h @ p["w_mu"] + p["b_mu"]
    lv = h @ p["w_lv"] + p["b_lv"]
    var = jnp.exp(lv) + EPS
    var = jnp.where(var <= 0.0, 1e-8, var)
    scale = jnp.sqrt(var)
    z = mu[None] + scale[None] * noise
    tp = jnp.maximum(jnp.einsum("sbt,tg->sbg", z, p["w_tg"] * p["m_tg"]) + p["b_tg"], 0.0)
    xrec = jnp.einsum("sbg,gk->sbk", tp, p["w_gg"] * p["m_gg"]) + p["b_gg"]
    return xrec, z, mu, scale


if __name__ == "__main__":
    key = jax.random.PRNGKey(0)
    k_x, k_p, k_n = jax.random.split(key, 3)

    # positive counts-like input (B, G)
    X = jax.random.uniform(k_x, (B, G), jnp.float32, 0.1, 2.0)
    params = init_params(k_p)
    noise = jax.random.normal(k_n, (S, B, T), jnp.float32)  # rsample standard normals

    # one-time packing of all static parameters into a single VMEM slab
    param_slab = prepare_param_slab(params)

    out = igtp_forward(X, noise, param_slab)
    jax.block_until_ready(out)

    # sanity check against pure-JAX reference
    xr_ref, z_ref, mu_ref, sc_ref = ref_forward(X, params, noise)
    assert out["X_rec"].shape == (S, B, G)
    assert out["z"].shape == (S, B, T)
    assert jnp.allclose(out["X_rec"], xr_ref, rtol=1e-2, atol=1e-2)
    assert jnp.allclose(out["z"], z_ref, rtol=1e-2, atol=1e-2)
    assert jnp.allclose(out["q"][0], mu_ref, rtol=1e-2, atol=1e-2)
    assert jnp.allclose(out["q"][1], sc_ref, rtol=1e-2, atol=1e-2)

    print("KERNEL_OK")
</pallas_src>

<mosaic_0001>
module attributes {stable_mosaic.version = 11 : i64} {
  func.func @igtp_kernel(%arg0: memref<152x128xf32, #tpu.memory_space<vmem>>, %arg1: memref<16x128xf32, #tpu.memory_space<vmem>>, %arg2: memref<8x128xf32, #tpu.memory_space<vmem>>) attributes {dimension_semantics = [], scalar_prefetch = 0 : i64, scratch_operands = 0 : i64, tpu.core_type = #tpu.core_type<tc>} {
    %c0 = arith.constant 0 : index
    %c0_0 = arith.constant 0 : index
    %0 = vector.load %arg0[%c0, %c0_0] : memref<152x128xf32, #tpu.memory_space<vmem>>, vector<32x32xf32>
    %c32 = arith.constant 32 : index
    %c0_1 = arith.constant 0 : index
    %1 = vector.load %arg0[%c32, %c0_1] : memref<152x128xf32, #tpu.memory_space<vmem>>, vector<32x16xf32>
    %c64 = arith.constant 64 : index
    %c0_2 = arith.constant 0 : index
    %2 = vector.load %arg0[%c64, %c0_2] : memref<152x128xf32, #tpu.memory_space<vmem>>, vector<16x16xf32>
    %c80 = arith.constant 80 : index
    %c0_3 = arith.constant 0 : index
    %3 = vector.load %arg0[%c80, %c0_3] : memref<152x128xf32, #tpu.memory_space<vmem>>, vector<16x16xf32>
    %c96 = arith.constant 96 : index
    %c0_4 = arith.constant 0 : index
    %4 = vector.load %arg0[%c96, %c0_4] : memref<152x128xf32, #tpu.memory_space<vmem>>, vector<8x32xf32>
    %c104 = arith.constant 104 : index
    %c0_5 = arith.constant 0 : index
    %5 = vector.load %arg0[%c104, %c0_5] : memref<152x128xf32, #tpu.memory_space<vmem>>, vector<32x32xf32>
    %c136 = arith.constant 136 : index
    %c0_6 = arith.constant 0 : index
    %6 = vector.load %arg0[%c136, %c0_6] : memref<152x128xf32, #tpu.memory_space<vmem>>, vector<1x32xf32>
    %c137 = arith.constant 137 : index
    %c0_7 = arith.constant 0 : index
    %7 = vector.load %arg0[%c137, %c0_7] : memref<152x128xf32, #tpu.memory_space<vmem>>, vector<1x16xf32>
    %c138 = arith.constant 138 : index
    %c0_8 = arith.constant 0 : index
    %8 = vector.load %arg0[%c138, %c0_8] : memref<152x128xf32, #tpu.memory_space<vmem>>, vector<1x16xf32>
    %c139 = arith.constant 139 : index
    %c0_9 = arith.constant 0 : index
    %9 = vector.load %arg0[%c139, %c0_9] : memref<152x128xf32, #tpu.memory_space<vmem>>, vector<1x16xf32>
    %c140 = arith.constant 140 : index
    %c0_10 = arith.constant 0 : index
    %10 = vector.load %arg0[%c140, %c0_10] : memref<152x128xf32, #tpu.memory_space<vmem>>, vector<1x32xf32>
    %c141 = arith.constant 141 : index
    %c0_11 = arith.constant 0 : index
    %11 = vector.load %arg0[%c141, %c0_11] : memref<152x128xf32, #tpu.memory_space<vmem>>, vector<1x32xf32>
    %c142 = arith.constant 142 : index
    %c0_12 = arith.constant 0 : index
    %12 = vector.load %arg0[%c142, %c0_12] : memref<152x128xf32, #tpu.memory_space<vmem>>, vector<1x32xf32>
    %c143 = arith.constant 143 : index
    %c0_13 = arith.constant 0 : index
    %13 = vector.load %arg0[%c143, %c0_13] : memref<152x128xf32, #tpu.memory_space<vmem>>, vector<1x16xf32>
    %c144 = arith.constant 144 : index
    %c0_14 = arith.constant 0 : index
    %14 = vector.load %arg0[%c144, %c0_14] : memref<152x128xf32, #tpu.memory_space<vmem>>, vector<1x16xf32>
    %c0_15 = arith.constant 0 : index
    %c0_16 = arith.constant 0 : index
    %15 = vector.load %arg1[%c0_15, %c0_16] : memref<16x128xf32, #tpu.memory_space<vmem>>, vector<8x8xf32>
    %c8 = arith.constant 8 : index
    %c0_17 = arith.constant 0 : index
    %16 = vector.load %arg1[%c8, %c0_17] : memref<16x128xf32, #tpu.memory_space<vmem>>, vector<8x32xf32>
    %cst = arith.constant dense<0.000000e+00> : vector<8x32xf32>
    %17 = tpu.matmul %16, %0, %cst {dimension_numbers = #tpu.dot_dimension_numbers<[1], [0], [0], [1], [0, 0, 1, 1], [], []>} : vector<8x32xf32>, vector<32x32xf32>, vector<8x32xf32> -> vector<8x32xf32>
    %18 = vector.broadcast %6 : vector<1x32xf32> to vector<8x32xf32>
    %19 = arith.addf %17, %18 : vector<8x32xf32>
    %cst_18 = arith.constant 0.000000e+00 : f32
    %20 = vector.broadcast %cst_18 : f32 to vector<8x32xf32>
    %21 = arith.cmpf oge, %19, %20 : vector<8x32xf32>
    %22 = vector.broadcast %12 : vector<1x32xf32> to vector<8x32xf32>
    %23 = arith.mulf %22, %19 : vector<8x32xf32>
    %24 = arith.select %21, %19, %23 : vector<8x32xi1>, vector<8x32xf32>
    %cst_19 = arith.constant dense<0.000000e+00> : vector<8x16xf32>
    %25 = tpu.matmul %24, %1, %cst_19 {dimension_numbers = #tpu.dot_dimension_numbers<[1], [0], [0], [1], [0, 0, 1, 1], [], []>} : vector<8x32xf32>, vector<32x16xf32>, vector<8x16xf32> -> vector<8x16xf32>
    %26 = vector.broadcast %7 : vector<1x16xf32> to vector<8x16xf32>
    %27 = arith.addf %25, %26 : vector<8x16xf32>
    %cst_20 = arith.constant 0.000000e+00 : f32
    %28 = vector.broadcast %cst_20 : f32 to vector<8x16xf32>
    %29 = arith.cmpf oge, %27, %28 : vector<8x16xf32>
    %30 = vector.broadcast %13 : vector<1x16xf32> to vector<8x16xf32>
    %31 = arith.mulf %30, %27 : vector<8x16xf32>
    %32 = arith.select %29, %27, %31 : vector<8x16xi1>, vector<8x16xf32>
    %cst_21 = arith.constant dense<0.000000e+00> : vector<8x16xf32>
    %33 = tpu.matmul %32, %2, %cst_21 {dimension_numbers = #tpu.dot_dimension_numbers<[1], [0], [0], [1], [0, 0, 1, 1], [], []>} : vector<8x16xf32>, vector<16x16xf32>, vector<8x16xf32> -> vector<8x16xf32>
    %34 = vector.broadcast %8 : vector<1x16xf32> to vector<8x16xf32>
    %35 = arith.addf %33, %34 : vector<8x16xf32>
    %cst_22 = arith.constant 0.000000e+00 : f32
    %36 = vector.broadcast %cst_22 : f32 to vector<8x16xf32>
    %37 = arith.cmpf oge, %35, %36 : vector<8x16xf32>
    %38 = vector.broadcast %14 : vector<1x16xf32> to vector<8x16xf32>
    %39 = arith.mulf %38, %35 : vector<8x16xf32>
    %40 = arith.select %37, %35, %39 : vector<8x16xi1>, vector<8x16xf32>
    %cst_23 = arith.constant dense<0.000000e+00> : vector<8x16xf32>
    %41 = tpu.matmul %40, %3, %cst_23 {dimension_numbers = #tpu.dot_dimension_numbers<[1], [0], [0], [1], [0, 0, 1, 1], [], []>} : vector<8x16xf32>, vector<16x16xf32>, vector<8x16xf32> -> vector<8x16xf32>
    %42 = vector.broadcast %9 : vector<1x16xf32> to vector<8x16xf32>
    %43 = arith.addf %41, %42 : vector<8x16xf32>
    %44 = vector.extract_strided_slice %43 {offsets = [0, 0], sizes = [8, 8], strides = [1, 1]} : vector<8x16xf32> to vector<8x8xf32>
    %45 = vector.extract_strided_slice %43 {offsets = [0, 8], sizes = [8, 8], strides = [1, 1]} : vector<8x16xf32> to vector<8x8xf32>
    %46 = math.exp %45 : vector<8x8xf32>
    %cst_24 = arith.constant 9.99999997E-7 : f32
    %47 = vector.broadcast %cst_24 : f32 to vector<8x8xf32>
    %48 = arith.addf %46, %47 : vector<8x8xf32>
    %49 = math.sqrt %48 : vector<8x8xf32>
    %50 = arith.mulf %49, %15 : vector<8x8xf32>
    %51 = arith.addf %44, %50 : vector<8x8xf32>
    %cst_25 = arith.constant dense<0.000000e+00> : vector<8x32xf32>
    %52 = tpu.matmul %51, %4, %cst_25 {dimension_numbers = #tpu.dot_dimension_numbers<[1], [0], [0], [1], [0, 0, 1, 1], [], []>} : vector<8x8xf32>, vector<8x32xf32>, vector<8x32xf32> -> vector<8x32xf32>
    %53 = vector.broadcast %10 : vector<1x32xf32> to vector<8x32xf32>
    %54 = arith.addf %52, %53 : vector<8x32xf32>
    %cst_26 = arith.constant 0.000000e+00 : f32
    %55 = vector.broadcast %cst_26 : f32 to vector<8x32xf32>
    %56 = arith.maximumf %54, %55 : vector<8x32xf32>
    %cst_27 = arith.constant dense<0.000000e+00> : vector<8x32xf32>
    %57 = tpu.matmul %56, %5, %cst_27 {dimension_numbers = #tpu.dot_dimension_numbers<[1], [0], [0], [1], [0, 0, 1, 1], [], []>} : vector<8x32xf32>, vector<32x32xf32>, vector<8x32xf32> -> vector<8x32xf32>
    %58 = vector.broadcast %11 : vector<1x32xf32> to vector<8x32xf32>
    %59 = arith.addf %57, %58 : vector<8x32xf32>
    %cst_28 = arith.constant 0.000000e+00 : f32
    %60 = vector.broadcast %cst_28 : f32 to vector<8x128xf32>
    %c0_29 = arith.constant 0 : index
    %c0_30 = arith.constant 0 : index
    %61 = vector.load %arg2[%c0_29, %c0_30] : memref<8x128xf32, #tpu.memory_space<vmem>>, vector<8x128xf32>
    tpu.vector_store %arg2[%c0_29, %c0_30], %60 {strides = array<i32>} : memref<8x128xf32, #tpu.memory_space<vmem>>, vector<8x128xf32>,
    %c0_31 = arith.constant 0 : index
    %c0_32 = arith.constant 0 : index
    %62 = vector.load %arg2[%c0_31, %c0_32] : memref<8x128xf32, #tpu.memory_space<vmem>>, vector<8x32xf32>
    tpu.vector_store %arg2[%c0_31, %c0_32], %59 {strides = array<i32>} : memref<8x128xf32, #tpu.memory_space<vmem>>, vector<8x32xf32>,
    %c0_33 = arith.constant 0 : index
    %c32_34 = arith.constant 32 : index
    %63 = vector.load %arg2[%c0_33, %c32_34] : memref<8x128xf32, #tpu.memory_space<vmem>>, vector<8x8xf32>
    tpu.vector_store %arg2[%c0_33, %c32_34], %51 {strides = array<i32>} : memref<8x128xf32, #tpu.memory_space<vmem>>, vector<8x8xf32>,
    %c0_35 = arith.constant 0 : index
    %c40 = arith.constant 40 : index
    %64 = vector.load %arg2[%c0_35, %c40] : memref<8x128xf32, #tpu.memory_space<vmem>>, vector<8x8xf32>
    tpu.vector_store %arg2[%c0_35, %c40], %44 {strides = array<i32>} : memref<8x128xf32, #tpu.memory_space<vmem>>, vector<8x8xf32>,
    %c0_36 = arith.constant 0 : index
    %c48 = arith.constant 48 : index
    %65 = vector.load %arg2[%c0_36, %c48] : memref<8x128xf32, #tpu.memory_space<vmem>>, vector<8x8xf32>
    tpu.vector_store %arg2[%c0_36, %c48], %49 {strides = array<i32>} : memref<8x128xf32, #tpu.memory_space<vmem>>, vector<8x8xf32>,
    return
  }
}

</mosaic_0001>

<llo_original>
// kernel: igtp_forward.1
$region0: #{igtp_forward.1}
  #allocation0 [shape = 'u32[]', space=smem, size = 0x4, offset = 0x4, fixed_abs, tag = 'smem constant byte address 0x4 - core index']
  #allocation1 [shape = 'u32[72,128]{1,0:T(1,128)}', space=vmem, size = 0x9000, scoped, tag = 'internal scratch']
  %s0 = inlined_call_operand.hbm [shape: f32[152,128], index: 0, kind: input, shape index: {}]
  %s1 = inlined_call_operand.vmem [shape: f32[16,128], index: 1, kind: input, shape index: {}]
  %s2 = inlined_call_operand.vmem [shape: f32[8,128], index: 2, kind: output, shape index: {}]
  %s3 = sld [smem:[#allocation0]]
  $region22: #{igtp_forward.1} parent=0
    _
  %s5 = ssub.s32 1, %s3
  %s6 = scalar_select 0, %s5, %s3
  $region1: #{igtp_forward.1} parent=0
    #allocation2 [shape = 'u8[77824]{0}', space=vmem, size = 0x13000, scoped, tag = 'input window, operand 0, single buffered']
    #allocation3 [shape = 's32[1]{0}', space=sflag, size = 0x4, scoped, tag = 'scoped memory for igtp_forward.1']
    %7 = vsyncpa [#allocation3], 0
    // Predicated region
    $region2: #{igtp_forward.1} parent=1 // pred_check
      _
    $region3: #{igtp_forward.1} parent=1 // pred_check_branch
      %9 = sbr.rel (0) target = $region5
    $region4: #{igtp_forward.1} parent=1 // pred_region
      %11 = vsyncadd [#allocation3], 0
      %s12 = sshll.u32 %s0, 4
      %s13 = int_to_ptr.hbm [resolvable:$true] %s12
      %s14 = sshll.u32 [#allocation2], 4
      %s15 = int_to_ptr.vmem [resolvable:$true] %s14
      %20 = dma.hbm_to_vmem [thread:$0]  %s13, 2432, %s15, [#allocation3], 128, 128, 8
    $region5: #{igtp_forward.1} parent=1 // pred_fallthru
      _
    // Predicated region
    $region6: #{igtp_forward.1} parent=1 // pred_check
      _
    $region7: #{igtp_forward.1} parent=1 // pred_check_branch
      %22 = sbr.rel (0) target = $region9
    $region8: #{igtp_forward.1} parent=1 // pred_region
      _
    $region9: #{igtp_forward.1} parent=1 // pred_fallthru
      _
    // Predicated region
    $region10: #{igtp_forward.1} parent=1 // pred_check
      _
    $region11: #{igtp_forward.1} parent=1 // pred_check_branch
      %24 = sbr.rel (0) target = $region13
    $region12: #{igtp_forward.1} parent=1 // pred_region
      %26 = dma.done [#allocation3], 2432
    $region13: #{igtp_forward.1} parent=1 // pred_fallthru
      _
    %v27 = vld [vmem:[#allocation2] sm:$0xff]
    %v28 = vld [vmem:[#allocation2 + $0x8] sm:$0xff]
    %v29 = vld [vmem:[#allocation2 + $0x10] sm:$0xff]
    %v30 = vld [vmem:[#allocation2 + $0x18] sm:$0xff]
    %v31 = vld [vmem:[#allocation2 + $0x20] sm:$0xff]
    %v32 = vld [vmem:[#allocation2 + $0x28] sm:$0xff]
    %v33 = vld [vmem:[#allocation2 + $0x30] sm:$0xff]
    %v34 = vld [vmem:[#allocation2 + $0x38] sm:$0xff]
    %v35 = vld [vmem:[#allocation2 + $0x40] sm:$0xff]
    %v36 = vld [vmem:[#allocation2 + $0x48] sm:$0xff]
    %v37 = vld [vmem:[#allocation2 + $0x50] sm:$0xff]
    %v38 = vld [vmem:[#allocation2 + $0x58] sm:$0xff]
    %v39 = vld [vmem:[#allocation2 + $0x60] sm:$0xff]
    %v40 = vld [vmem:[#allocation2 + $0x68] sm:$0xff]
    %v41 = vld [vmem:[#allocation2 + $0x70] sm:$0xff]
    %v42 = vld [vmem:[#allocation2 + $0x78] sm:$0xff]
    %v43 = vld [vmem:[#allocation2 + $0x80] sm:$0xff]
    %v44 = vld [vmem:[#allocation2 + $0x88] sm:$0x1]
    %v45 = vld [vmem:[#allocation2 + $0x89] sm:$0x1]
    %v46 = vld [vmem:[#allocation2 + $0x8a] sm:$0x1]
    %v47 = vld [vmem:[#allocation2 + $0x8b] sm:$0x1]
    %v48 = vld [vmem:[#allocation2 + $0x8c] sm:$0x1]
    %v49 = vld [vmem:[#allocation2 + $0x8d] sm:$0x1]
    %v50 = vld [vmem:[#allocation2 + $0x8e] sm:$0x1]
    %v51 = vld [vmem:[#allocation2 + $0x8f] sm:$0x1]
    %v52 = vld [vmem:[#allocation2 + $0x90] sm:$0x1]
    %v53 = vld [vmem:[%s1] sm:$0xff]
    %v54 = vld [vmem:[%s1 + $0x8] sm:$0xff]
    %v55 = vperm.slane %v44, 0
    %vm56 = vcmask 261120
    %v58 = vsel %vm56, %v54, 0
    %60 = vmatpush.msra.mxu0 0.0
    %61 = vmatpush.msra.mxu0 0.0
    %62 = vmatpush.msra.mxu0 0.0
    %63 = vmatpush.msra.mxu0 0.0
    %64 = vmatpush.msra.mxu0 0.0
    %65 = vmatpush.msra.mxu0 0.0
    %66 = vmatpush.msra.mxu0 0.0
    %67 = vmatpush.msra.mxu0 0.0
    %68 = vmatpush.msra.mxu0 0.0
    %69 = vmatpush.msra.mxu0 0.0
    %70 = vmatpush.msra.mxu0 0.0
    %71 = vmatpush.msra.mxu0 0.0
    %72 = vmatpush.msra.mxu0 %v30
    %73 = vmatpush.msra.mxu0 %v29
    %74 = vmatpush.msra.mxu0 %v28
    %75 = vmatpush.msra.mxu0 %v27
    %76 = vmatmul.f32.gmra.mxu0 %v58
    %v77 = vpop.f32.mrf.mxu0
    %v78 = vadd.f32 %v55, %v77
    %79 = vdwg.mxu0
    %vm80 = vcmp.ge.f32.partialorder %v78, 0.0
    %v81 = vperm.slane %v50, 0
    %v82 = vmul.f32 %v81, %v78
    %v83 = vsel %vm80, %v78, %v82
    %v84 = vperm.slane %v45, 0
    %v86 = vsel %vm56, %v83, 0
    %88 = vmatpush.msra.mxu0 0.0
    %89 = vmatpush.msra.mxu0 0.0
    %90 = vmatpush.msra.mxu0 0.0
    %91 = vmatpush.msra.mxu0 0.0
    %92 = vmatpush.msra.mxu0 0.0
    %93 = vmatpush.msra.mxu0 0.0
    %94 = vmatpush.msra.mxu0 0.0
    %95 = vmatpush.msra.mxu0 0.0
    %96 = vmatpush.msra.mxu0 0.0
    %97 = vmatpush.msra.mxu0 0.0
    %98 = vmatpush.msra.mxu0 0.0
    %99 = vmatpush.msra.mxu0 0.0
    %100 = vmatpush.msra.mxu0 %v34
    %101 = vmatpush.msra.mxu0 %v33
    %102 = vmatpush.msra.mxu0 %v32
    %103 = vmatpush.msra.mxu0 %v31
    %104 = vmatmul.f32.gmra.mxu0 %v86
    %v105 = vpop.f32.mrf.mxu0
    %v106 = vadd.f32 %v84, %v105
    %107 = vdwg.mxu0
    %vm108 = vcmp.ge.f32.partialorder %v106, 0.0
    %v109 = vperm.slane %v51, 0
    %v110 = vmul.f32 %v109, %v106
    %v111 = vsel %vm108, %v106, %v110
    %v112 = vperm.slane %v46, 0
    %vm113 = vcmask 130048
    %v115 = vsel %vm113, %v111, 0
    %117 = vmatpush.msra.mxu0 0.0
    %118 = vmatpush.msra.mxu0 0.0
    %119 = vmatpush.msra.mxu0 0.0
    %120 = vmatpush.msra.mxu0 0.0
    %121 = vmatpush.msra.mxu0 0.0
    %122 = vmatpush.msra.mxu0 0.0
    %123 = vmatpush.msra.mxu0 0.0
    %124 = vmatpush.msra.mxu0 0.0
    %125 = vmatpush.msra.mxu0 0.0
    %126 = vmatpush.msra.mxu0 0.0
    %127 = vmatpush.msra.mxu0 0.0
    %128 = vmatpush.msra.mxu0 0.0
    %129 = vmatpush.msra.mxu0 0.0
    %130 = vmatpush.msra.mxu0 0.0
    %131 = vmatpush.msra.mxu0 %v36
    %132 = vmatpush.msra.mxu0 %v35
    %133 = vmatmul.f32.gmra.mxu0 %v115
    %v134 = vpop.f32.mrf.mxu0
    %v135 = vadd.f32 %v112, %v134
    %136 = vdwg.mxu0
    %vm137 = vcmp.ge.f32.partialorder %v135, 0.0
    %v138 = vperm.slane %v52, 0
    %v139 = vmul.f32 %v138, %v135
    %v140 = vsel %vm137, %v135, %v139
    %v141 = vperm.slane %v47, 0
    %v143 = vsel %vm113, %v140, 0
    %145 = vmatpush.msra.mxu0 0.0
    %146 = vmatpush.msra.mxu0 0.0
    %147 = vmatpush.msra.mxu0 0.0
    %148 = vmatpush.msra.mxu0 0.0
    %149 = vmatpush.msra.mxu0 0.0
    %150 = vmatpush.msra.mxu0 0.0
    %151 = vmatpush.msra.mxu0 0.0
    %152 = vmatpush.msra.mxu0 0.0
    %153 = vmatpush.msra.mxu0 0.0
    %154 = vmatpush.msra.mxu0 0.0
    %155 = vmatpush.msra.mxu0 0.0
    %156 = vmatpush.msra.mxu0 0.0
    %157 = vmatpush.msra.mxu0 0.0
    %158 = vmatpush.msra.mxu0 0.0
    %159 = vmatpush.msra.mxu0 %v38
    %160 = vmatpush.msra.mxu0 %v37
    %161 = vmatmul.f32.gmra.mxu0 %v143
    %v162 = vpop.f32.mrf.mxu0
    %v163 = vadd.f32 %v141, %v162
    %164 = vdwg.mxu0
    %v165 = vmul.f32 %v163, 1.442695
    %v166 = vpow.pop %v165
    %v167 = vadd.f32 %v166, 1e-06
    %v168 = vrsqrt.pop %v167
    %v169 = vmul.f32 %v168, %v167
    %v170 = vmul.f32 %v169, %v168
    %v171 = vmul.f32 0.5, %v170
    %v172 = vsub.f32 1.5, %v171
    %v173 = vmul.f32 %v168, %v172
    %v174 = vmul.f32 %v167, %v173
    %vm175 = vcmp.eq.f32.partialorder %v167, inf
    %v176 = vsel %vm175, %v167, %v174
    %vm177 = vcmp.eq.f32.partialorder %v167, 0.0
    %v178 = vand.u32 %v167, 2147483648
    %v179 = vsel %vm177, %v178, %v176
    %181 = vrot.lane.b32.xlu0 %v53, 8
    %v182 = vpop.permute.xlu0 %181
    %v184 = vmul.f32 %v179, %v182
    %186 = vrot.lane.b32.xlu0 %v184, 120
    %v187 = vpop.permute.xlu0 %186
    %v189 = vadd.f32 %v163, %v187
    %v190 = vperm.slane %v48, 0
    %vm191 = vcmask 64512
    %v193 = vsel %vm191, %v189, 0
    %195 = vmatpush.msra.mxu0 0.0
    %196 = vmatpush.msra.mxu0 0.0
    %197 = vmatpush.msra.mxu0 0.0
    %198 = vmatpush.msra.mxu0 0.0
    %199 = vmatpush.msra.mxu0 0.0
    %200 = vmatpush.msra.mxu0 0.0
    %201 = vmatpush.msra.mxu0 0.0
    %202 = vmatpush.msra.mxu0 0.0
    %203 = vmatpush.msra.mxu0 0.0
    %204 = vmatpush.msra.mxu0 0.0
    %205 = vmatpush.msra.mxu0 0.0
    %206 = vmatpush.msra.mxu0 0.0
    %207 = vmatpush.msra.mxu0 0.0
    %208 = vmatpush.msra.mxu0 0.0
    %209 = vmatpush.msra.mxu0 0.0
    %210 = vmatpush.msra.mxu0 %v39
    %211 = vmatmul.f32.gmra.mxu0 %v193
    %v212 = vpop.f32.mrf.mxu0
    %v213 = vadd.f32 %v190, %v212
    %214 = vdwg.mxu0
    %v215 = vmax.f32 %v213, 0.0
    %v216 = vperm.slane %v49, 0
    %v218 = vsel %vm56, %v215, 0
    %220 = vmatpush.msra.mxu0 0.0
    %221 = vmatpush.msra.mxu0 0.0
    %222 = vmatpush.msra.mxu0 0.0
    %223 = vmatpush.msra.mxu0 0.0
    %224 = vmatpush.msra.mxu0 0.0
    %225 = vmatpush.msra.mxu0 0.0
    %226 = vmatpush.msra.mxu0 0.0
    %227 = vmatpush.msra.mxu0 0.0
    %228 = vmatpush.msra.mxu0 0.0
    %229 = vmatpush.msra.mxu0 0.0
    %230 = vmatpush.msra.mxu0 0.0
    %231 = vmatpush.msra.mxu0 0.0
    %232 = vmatpush.msra.mxu0 %v43
    %233 = vmatpush.msra.mxu0 %v42
    %234 = vmatpush.msra.mxu0 %v41
    %235 = vmatpush.msra.mxu0 %v40
    %236 = vmatmul.f32.gmra.mxu0 %v218
    %v237 = vpop.f32.mrf.mxu0
    %v238 = vadd.f32 %v216, %v237
    %239 = vdwg.mxu0
    %240 = vst [vmem:[%s2] sm:$0xff] 0.0
    %241 = vst.msk [vmem:[%s2] sm:$0xff] %vm56, %v238
    %242 = vrot.lane.b32.xlu0 %v189, 32
    %v243 = vpop.permute.xlu0 %242
    %vm245 = vcmask 326912
    %246 = vst.msk [vmem:[%s2] sm:$0xff] %vm245, %v243
    %248 = vrot.lane.b32.xlu0 %v163, 40
    %v249 = vpop.permute.xlu0 %248
    %vm251 = vcmask 392512
    %252 = vst.msk [vmem:[%s2] sm:$0xff] %vm251, %v249
    %254 = vrot.lane.b32.xlu0 %v179, 40
    %v255 = vpop.permute.xlu0 %254
    %vm257 = vcmask 458112
    %258 = vst.msk [vmem:[%s2] sm:$0xff] %vm257, %v255
    // Predicated region
    $region14: #{igtp_forward.1} parent=1 // pred_check
      _
    $region15: #{igtp_forward.1} parent=1 // pred_check_branch
      %260 = sbr.rel (0) target = $region17
    $region16: #{igtp_forward.1} parent=1 // pred_region
      _
    $region17: #{igtp_forward.1} parent=1 // pred_fallthru
      _
    // Predicated region
    $region18: #{igtp_forward.1} parent=1 // pred_check
      _
    $region19: #{igtp_forward.1} parent=1 // pred_check_branch
      %262 = sbr.rel (0) target = $region21
    $region20: #{igtp_forward.1} parent=1 // pred_region
      _
    $region21: #{igtp_forward.1} parent=1 // pred_fallthru
      _
    %263 = vsyncpa [#allocation3], 1

</llo_original>
